<compile_context>
chip_gen: v7x
topology: tpu7x:2x2x1
jax: 0.10.0
libtpu: 0.0.40
codegen_flags: <defaults>
</compile_context>

<pallas_src>
import functools

import jax
import jax.numpy as jnp
from jax.experimental import pallas as pl
from jax.experimental.pallas import tpu as pltpu


def _round_up(x, m):
    return ((x + m - 1) // m) * m


# --------------------------- shared tower math -------------------------------
def _tower_from_rows(u_rows, i_rows, params, num_fc):
    """MLP tower + GMF + final affine + sigmoid from gathered embedding rows.

    u_rows / i_rows: (TB, dm + dg) combined [mlp | gmf] rows.
    params: [w0u_pad, w0i_pad, b0, w1, b1, ..., wa_mlp, wa_gmf_pad, ba].
    Matmuls accumulate in f32; all elementwise math is f32 (v5e-safe).
    """
    w0u, w0i, b0 = params[0], params[1], params[2]
    # Layer 0: the gmf lanes of the combined rows hit zero-padded weight rows,
    # so no in-kernel slicing / concat is needed.
    h = (jnp.dot(u_rows.astype(w0u.dtype), w0u, preferred_element_type=jnp.float32)
         + jnp.dot(i_rows.astype(w0i.dtype), w0i, preferred_element_type=jnp.float32)
         + b0)
    h = jnp.maximum(h, 0.0)

    off = 3
    for _ in range(1, num_fc):
        w, b = params[off], params[off + 1]
        off += 2
        h = jnp.dot(h.astype(w.dtype), w, preferred_element_type=jnp.float32) + b
        h = jnp.maximum(h, 0.0)

    wa_mlp, wa_gmf_pad, ba = params[off], params[off + 1], params[off + 2]
    # GMF branch: elementwise product of the full combined rows; the mlp lanes
    # are zeroed by wa_gmf_pad in the reduction (VPU multiply + XLU lane-reduce,
    # no N=1 MXU matmul, no concat).
    gmf = u_rows.astype(jnp.float32) * i_rows.astype(jnp.float32)
    logits = (jnp.sum(h * wa_mlp, axis=-1, keepdims=True)
              + jnp.sum(gmf * wa_gmf_pad, axis=-1, keepdims=True)
              + ba)
    return jax.nn.sigmoid(logits)


# ------------------------------ Pallas kernels --------------------------------
def _ncf_kernel_resident_gather(num_fc, idx_ref, utab_ref, itab_ref, *rest):
    """In-kernel gather: VMEM-resident tables + one-hot MXU row selection."""
    out_ref = rest[-1]
    params = [r[...] for r in rest[:-1]]

    idx = idx_ref[...]                     # (TB, 2) int32: [:,0]=user, [:,1]=item
    u_idx = idx[:, 0:1]
    i_idx = idx[:, 1:2]
    tb = idx.shape[0]

    utab = utab_ref[...]                   # (U, dm+dg), VMEM-resident across grid
    itab = itab_ref[...]                   # (I, dm+dg)
    onehot_u = (u_idx == jax.lax.broadcasted_iota(
        jnp.int32, (tb, utab.shape[0]), 1)).astype(utab.dtype)
    onehot_i = (i_idx == jax.lax.broadcasted_iota(
        jnp.int32, (tb, itab.shape[0]), 1)).astype(itab.dtype)
    # Exact row selection (0/1 weights), f32 accumulate.
    u_rows = jnp.dot(onehot_u, utab, preferred_element_type=jnp.float32)
    i_rows = jnp.dot(onehot_i, itab, preferred_element_type=jnp.float32)

    out_ref[...] = _tower_from_rows(u_rows, i_rows, params, num_fc).astype(out_ref.dtype)


def _ncf_kernel_rows(num_fc, u_ref, i_ref, *rest):
    """Fallback: rows were gathered by XLA in the wrapper (large-vocab tables)."""
    out_ref = rest[-1]
    params = [r[...] for r in rest[:-1]]
    out_ref[...] = _tower_from_rows(u_ref[...], i_ref[...], params, num_fc).astype(out_ref.dtype)


# ------------------------- one-time parameter prep ----------------------------
def prepare_params(params, compute_dtype=jnp.bfloat16):
    """Pack tables/weights once so the kernel needs no concat / slicing.

    * Combined [mlp | gmf] embedding tables per stream (user / item).
    * W0 split into user/item halves, zero-padded over the gmf lanes.
    * Final affine weight split into an MLP part and a zero-padded GMF part.
    """
    dm = params["emb_user_mlp"].shape[1]
    dg = params["emb_user_gmf"].shape[1]
    fc_ws = params["fc_weights"]
    fc_bs = params["fc_biases"]
    assert fc_ws[0].shape[0] == 2 * dm, "layers[0] must equal 2*latent_dim_mlp"

    user_tab = jnp.concatenate(
        [params["emb_user_mlp"], params["emb_user_gmf"]], axis=1).astype(compute_dtype)
    item_tab = jnp.concatenate(
        [params["emb_item_mlp"], params["emb_item_gmf"]], axis=1).astype(compute_dtype)

    w0 = fc_ws[0]
    l1 = w0.shape[1]
    zpad = jnp.zeros((dg, l1), w0.dtype)
    w0u = jnp.concatenate([w0[:dm], zpad], axis=0).astype(compute_dtype)        # (dm+dg, l1)
    w0i = jnp.concatenate([w0[dm:2 * dm], zpad], axis=0).astype(compute_dtype)  # (dm+dg, l1)
    b0 = fc_bs[0].astype(jnp.float32)

    weight_args = [w0u, w0i, b0]
    for w, b in zip(fc_ws[1:], fc_bs[1:]):
        weight_args += [w.astype(compute_dtype), b.astype(jnp.float32)]

    la = fc_ws[-1].shape[1]
    wa = params["affine_w"]                                   # (la + dg, 1)
    wa_mlp = wa[:la].reshape(1, la).astype(jnp.float32)
    wa_gmf_pad = jnp.concatenate(
        [jnp.zeros((dm, 1), wa.dtype), wa[la:]], axis=0).reshape(1, dm + dg).astype(jnp.float32)
    ba = params["affine_b"].reshape(1, 1).astype(jnp.float32)
    weight_args += [wa_mlp, wa_gmf_pad, ba]

    return {"user_tab": user_tab, "item_tab": item_tab,
            "weight_args": weight_args, "num_fc": len(fc_ws)}


# ------------------------------ tile selection --------------------------------
def _choose_tile(batch, tb, gather_in_kernel, num_user_rows, num_item_rows,
                 itemsize, vmem_budget_bytes):
    lane = 128
    pb = _round_up(batch, 8)
    tb_eff = max(8, min(_round_up(tb, 8), pb))
    # v7x megacore: keep >= 2 grid steps when the batch allows it so
    # dimension_semantics=("parallel",) can shard the batch loop over both TCs.
    if pb >= 16:
        tb_eff = min(tb_eff, _round_up((pb + 1) // 2, 8))

    def vmem_bytes(t):
        out = 2 * t * lane * 4                       # (TB,1) out block, lane-padded, 2 bufs
        act = 3 * t * lane * 4                       # f32 rows / hidden activations
        if gather_in_kernel:
            idx = 2 * t * lane * 4                   # (TB,2) int32 block, 2 bufs
            onehot = t * (_round_up(num_user_rows, lane)
                          + _round_up(num_item_rows, lane)) * itemsize
            tabs = 2 * (num_user_rows + num_item_rows) * lane * itemsize
            return out + act + idx + onehot + tabs
        ins = 2 * 2 * t * lane * itemsize            # gathered row blocks, 2 bufs each
        return out + act + ins

    # Conservative budget keeps us under every generation's default scoped VMEM
    # (v5e 16 MiB / v6e+v7x 32 MiB) without touching vmem_limit_bytes.
    while tb_eff > 8 and vmem_bytes(tb_eff) > vmem_budget_bytes:
        tb_eff = max(8, _round_up(tb_eff // 2, 8))

    padded = _round_up(batch, tb_eff)
    return tb_eff, padded, padded // tb_eff


# --------------------------------- wrapper ------------------------------------
def ncf_forward(user_indices, item_indices, prepared, *, tb=2048,
                gather_in_kernel=None, vmem_budget_bytes=10 * 1024 * 1024):
    """NCF forward. Embedding gather + MLP tower + GMF + affine + sigmoid.

    `prepared` comes from prepare_params (call once per set of weights)."""
    batch = user_indices.shape[0]
    user_tab = prepared["user_tab"]
    item_tab = prepared["item_tab"]
    weight_args = prepared["weight_args"]
    num_fc = prepared["num_fc"]
    num_u, dmg = user_tab.shape
    num_i = item_tab.shape[0]
    itemsize = jnp.dtype(user_tab.dtype).itemsize

    if gather_in_kernel is None:
        # Keep tables VMEM-resident (lane-padded, double-buffer budgeted) only
        # when they comfortably fit; otherwise fall back to an XLA gather.
        gather_in_kernel = (max(num_u, num_i) <= 4096 and
                            (num_u + num_i) * 128 * itemsize * 2 <= 4 * 1024 * 1024)

    tb_eff, padded, grid_b = _choose_tile(batch, tb, gather_in_kernel,
                                          num_u, num_i, itemsize, vmem_budget_bytes)

    u_idx = user_indices.astype(jnp.int32)
    i_idx = item_indices.astype(jnp.int32)
    if padded != batch:
        pad = padded - batch
        u_idx = jnp.concatenate([u_idx, jnp.zeros((pad,), jnp.int32)])
        i_idx = jnp.concatenate([i_idx, jnp.zeros((pad,), jnp.int32)])

    def const_spec(arr):
        return pl.BlockSpec(arr.shape, lambda b: (0, 0))

    weight_specs = [const_spec(a) for a in weight_args]
    out_spec = pl.BlockSpec((tb_eff, 1), lambda b: (b, 0))
    out_shape = jax.ShapeDtypeStruct((padded, 1), jnp.float32)
    cparams = pltpu.CompilerParams(dimension_semantics=("parallel",))

    if gather_in_kernel:
        idx = jnp.stack([u_idx, i_idx], axis=1)                # (padded, 2) int32
        in_specs = ([pl.BlockSpec((tb_eff, 2), lambda b: (b, 0)),
                     const_spec(user_tab), const_spec(item_tab)]
                    + weight_specs)
        out = pl.pallas_call(
            functools.partial(_ncf_kernel_resident_gather, num_fc),
            out_shape=out_shape,
            grid=(grid_b,),
            in_specs=in_specs,
            out_specs=out_spec,
            compiler_params=cparams,
        )(idx, user_tab, item_tab, *weight_args)
    else:
        # TODO(synk): large-vocab tables still gather via XLA (materialize + re-read);
        # per-row pltpu.make_async_copy gather is descriptor-issue bound at these
        # row sizes -- a batched / SparseCore gather is the proper large-table fix.
        u_rows = jnp.take(user_tab, u_idx, axis=0)
        i_rows = jnp.take(item_tab, i_idx, axis=0)
        in_specs = ([pl.BlockSpec((tb_eff, dmg), lambda b: (b, 0)),
                     pl.BlockSpec((tb_eff, dmg), lambda b: (b, 0))]
                    + weight_specs)
        out = pl.pallas_call(
            functools.partial(_ncf_kernel_rows, num_fc),
            out_shape=out_shape,
            grid=(grid_b,),
            in_specs=in_specs,
            out_specs=out_spec,
            compiler_params=cparams,
        )(u_rows, i_rows, *weight_args)

    return out[:batch]


# -------------------------- parameter construction ----------------------------
def make_params(key, num_users, num_items, latent_dim_mlp, latent_dim_gmf, layers):
    keys = jax.random.split(key, 16)
    k = iter(keys)

    def init(shape, kk, scale=0.1):
        return (scale * jax.random.normal(kk, shape)).astype(jnp.float32)

    params = {
        "emb_user_mlp": init((num_users, latent_dim_mlp), next(k)),
        "emb_item_mlp": init((num_items, latent_dim_mlp), next(k)),
        "emb_user_gmf": init((num_users, latent_dim_gmf), next(k)),
        "emb_item_gmf": init((num_items, latent_dim_gmf), next(k)),
    }
    fc_ws, fc_bs = [], []
    for in_size, out_size in zip(layers[:-1], layers[1:]):
        fc_ws.append(init((in_size, out_size), next(k)))
        fc_bs.append(init((1, out_size), next(k)))
    params["fc_weights"] = fc_ws
    params["fc_biases"] = fc_bs
    params["affine_w"] = init((layers[-1] + latent_dim_gmf, 1), next(k))
    params["affine_b"] = init((1, 1), next(k))
    return params


# --------------------------------- reference -----------------------------------
def ncf_reference(user_indices, item_indices, params):
    u_mlp = jnp.take(params["emb_user_mlp"], user_indices, axis=0)
    i_mlp = jnp.take(params["emb_item_mlp"], item_indices, axis=0)
    u_gmf = jnp.take(params["emb_user_gmf"], user_indices, axis=0)
    i_gmf = jnp.take(params["emb_item_gmf"], item_indices, axis=0)
    h = jnp.concatenate([u_mlp, i_mlp], axis=-1)
    gmf = u_gmf * i_gmf
    for w, b in zip(params["fc_weights"], params["fc_biases"]):
        h = jnp.maximum(h @ w + b, 0.0)
    vec = jnp.concatenate([h, gmf], axis=-1)
    return jax.nn.sigmoid(vec @ params["affine_w"] + params["affine_b"])


# ----------------------------------- main ---------------------------------------
if __name__ == "__main__":
    num_users = 32
    num_items = 64
    latent_dim_mlp = 16
    latent_dim_gmf = 8
    layers = [2 * latent_dim_mlp, 64, 32, 16]

    key = jax.random.PRNGKey(0)
    kp, ku, ki, ku2, ki2 = jax.random.split(key, 5)
    params = make_params(kp, num_users, num_items, latent_dim_mlp, latent_dim_gmf, layers)
    prep_f32 = prepare_params(params, compute_dtype=jnp.float32)
    prep_bf16 = prepare_params(params)                      # default bf16 streams

    # 1) Small batch, single tile, f32, in-kernel (one-hot MXU) gather.
    batch = 8
    u = jax.random.randint(ku, (batch,), 0, num_users, dtype=jnp.int32)
    it = jax.random.randint(ki, (batch,), 0, num_items, dtype=jnp.int32)
    out = jax.block_until_ready(ncf_forward(u, it, prep_f32))
    ref = ncf_reference(u, it, params)
    assert out.shape == (batch, 1)
    assert jnp.allclose(out, ref, atol=1e-4, rtol=1e-4), (out, ref)

    # 2) Larger batch: padding + multi-step grid (>= 2 steps for megacore), f32.
    big = 200
    ub = jax.random.randint(ku2, (big,), 0, num_users, dtype=jnp.int32)
    ib = jax.random.randint(ki2, (big,), 0, num_items, dtype=jnp.int32)
    out_big = jax.block_until_ready(ncf_forward(ub, ib, prep_f32, tb=64))
    ref_big = ncf_reference(ub, ib, params)
    assert out_big.shape == (big, 1)
    assert jnp.allclose(out_big, ref_big, atol=1e-4, rtol=1e-4)

    # 3) Fallback path (as used when tables are too large for VMEM), f32.
    out_fb = jax.block_until_ready(
        ncf_forward(ub, ib, prep_f32, tb=64, gather_in_kernel=False))
    assert jnp.allclose(out_fb, ref_big, atol=1e-4, rtol=1e-4)

    # 4) Default bf16 streams (f32 accumulate / elementwise): loose tolerance.
    out_bf = jax.block_until_ready(ncf_forward(ub, ib, prep_bf16))
    assert out_bf.shape == (big, 1)
    assert jnp.all(jnp.isfinite(out_bf))
    assert jnp.max(jnp.abs(out_bf - ref_big)) < 5e-2

    print("KERNEL_OK")
</pallas_src>

<mosaic_0001>
module attributes {stable_mosaic.version = 11 : i64} {
  func.func @_ncf_kernel_resident_gather(%arg0: i32, %arg1: memref<8x2xi32, #tpu.memory_space<vmem>>, %arg2: memref<32x24xf32, #tpu.memory_space<vmem>>, %arg3: memref<64x24xf32, #tpu.memory_space<vmem>>, %arg4: memref<24x64xf32, #tpu.memory_space<vmem>>, %arg5: memref<24x64xf32, #tpu.memory_space<vmem>>, %arg6: memref<1x64xf32, #tpu.memory_space<vmem>>, %arg7: memref<64x32xf32, #tpu.memory_space<vmem>>, %arg8: memref<1x32xf32, #tpu.memory_space<vmem>>, %arg9: memref<32x16xf32, #tpu.memory_space<vmem>>, %arg10: memref<1x16xf32, #tpu.memory_space<vmem>>, %arg11: memref<1x16xf32, #tpu.memory_space<vmem>>, %arg12: memref<1x24xf32, #tpu.memory_space<vmem>>, %arg13: memref<1x1xf32, #tpu.memory_space<vmem>>, %arg14: memref<8x1xf32, #tpu.memory_space<vmem>>) attributes {dimension_semantics = [#tpu.dimension_semantics<parallel>], iteration_bounds = array<i64: 1>, scalar_prefetch = 0 : i64, scratch_operands = 0 : i64, tpu.core_type = #tpu.core_type<tc>, window_params = [{transform_indices = @transform_0, window_bounds = array<i64: 8, 2>}, {pipeline_mode = #tpu.pipeline_mode<synchronous>, transform_indices = @transform_1, window_bounds = array<i64: 32, 24>}, {pipeline_mode = #tpu.pipeline_mode<synchronous>, transform_indices = @transform_2, window_bounds = array<i64: 64, 24>}, {pipeline_mode = #tpu.pipeline_mode<synchronous>, transform_indices = @transform_3, window_bounds = array<i64: 24, 64>}, {pipeline_mode = #tpu.pipeline_mode<synchronous>, transform_indices = @transform_4, window_bounds = array<i64: 24, 64>}, {pipeline_mode = #tpu.pipeline_mode<synchronous>, transform_indices = @transform_5, window_bounds = array<i64: 1, 64>}, {pipeline_mode = #tpu.pipeline_mode<synchronous>, transform_indices = @transform_6, window_bounds = array<i64: 64, 32>}, {pipeline_mode = #tpu.pipeline_mode<synchronous>, transform_indices = @transform_7, window_bounds = array<i64: 1, 32>}, {pipeline_mode = #tpu.pipeline_mode<synchronous>, transform_indices = @transform_8, window_bounds = array<i64: 32, 16>}, {pipeline_mode = #tpu.pipeline_mode<synchronous>, transform_indices = @transform_9, window_bounds = array<i64: 1, 16>}, {pipeline_mode = #tpu.pipeline_mode<synchronous>, transform_indices = @transform_10, window_bounds = array<i64: 1, 16>}, {pipeline_mode = #tpu.pipeline_mode<synchronous>, transform_indices = @transform_11, window_bounds = array<i64: 1, 24>}, {pipeline_mode = #tpu.pipeline_mode<synchronous>, transform_indices = @transform_12, window_bounds = array<i64: 1, 1>}, {transform_indices = @transform_13, window_bounds = array<i64: 8, 1>}]} {
    %c0 = arith.constant 0 : index
    %c0_0 = arith.constant 0 : index
    %0 = vector.load %arg4[%c0, %c0_0] : memref<24x64xf32, #tpu.memory_space<vmem>>, vector<24x64xf32>
    %c0_1 = arith.constant 0 : index
    %c0_2 = arith.constant 0 : index
    %1 = vector.load %arg5[%c0_1, %c0_2] : memref<24x64xf32, #tpu.memory_space<vmem>>, vector<24x64xf32>
    %c0_3 = arith.constant 0 : index
    %c0_4 = arith.constant 0 : index
    %2 = vector.load %arg6[%c0_3, %c0_4] : memref<1x64xf32, #tpu.memory_space<vmem>>, vector<1x64xf32>
    %c0_5 = arith.constant 0 : index
    %c0_6 = arith.constant 0 : index
    %3 = vector.load %arg7[%c0_5, %c0_6] : memref<64x32xf32, #tpu.memory_space<vmem>>, vector<64x32xf32>
    %c0_7 = arith.constant 0 : index
    %c0_8 = arith.constant 0 : index
    %4 = vector.load %arg8[%c0_7, %c0_8] : memref<1x32xf32, #tpu.memory_space<vmem>>, vector<1x32xf32>
    %c0_9 = arith.constant 0 : index
    %c0_10 = arith.constant 0 : index
    %5 = vector.load %arg9[%c0_9, %c0_10] : memref<32x16xf32, #tpu.memory_space<vmem>>, vector<32x16xf32>
    %c0_11 = arith.constant 0 : index
    %c0_12 = arith.constant 0 : index
    %6 = vector.load %arg10[%c0_11, %c0_12] : memref<1x16xf32, #tpu.memory_space<vmem>>, vector<1x16xf32>
    %c0_13 = arith.constant 0 : index
    %c0_14 = arith.constant 0 : index
    %7 = vector.load %arg11[%c0_13, %c0_14] : memref<1x16xf32, #tpu.memory_space<vmem>>, vector<1x16xf32>
    %c0_15 = arith.constant 0 : index
    %c0_16 = arith.constant 0 : index
    %8 = vector.load %arg12[%c0_15, %c0_16] : memref<1x24xf32, #tpu.memory_space<vmem>>, vector<1x24xf32>
    %c0_17 = arith.constant 0 : index
    %c0_18 = arith.constant 0 : index
    %9 = vector.load %arg13[%c0_17, %c0_18] : memref<1x1xf32, #tpu.memory_space<vmem>>, vector<1x1xf32>
    %c0_19 = arith.constant 0 : index
    %c0_20 = arith.constant 0 : index
    %10 = vector.load %arg1[%c0_19, %c0_20] : memref<8x2xi32, #tpu.memory_space<vmem>>, vector<8x2xi32>
    %11 = vector.extract_strided_slice %10 {offsets = [0, 0], sizes = [8, 1], strides = [1, 1]} : vector<8x2xi32> to vector<8x1xi32>
    %12 = vector.extract_strided_slice %10 {offsets = [0, 1], sizes = [8, 1], strides = [1, 1]} : vector<8x2xi32> to vector<8x1xi32>
    %c0_21 = arith.constant 0 : index
    %c0_22 = arith.constant 0 : index
    %13 = vector.load %arg2[%c0_21, %c0_22] : memref<32x24xf32, #tpu.memory_space<vmem>>, vector<32x24xf32>
    %c0_23 = arith.constant 0 : index
    %c0_24 = arith.constant 0 : index
    %14 = vector.load %arg3[%c0_23, %c0_24] : memref<64x24xf32, #tpu.memory_space<vmem>>, vector<64x24xf32>
    %15 = tpu.iota {dimensions = array<i32: 1>} : vector<8x32xi32>
    %16 = vector.broadcast %11 : vector<8x1xi32> to vector<8x32xi32>
    %17 = arith.cmpi eq, %16, %15 : vector<8x32xi32>
    %18 = arith.extui %17 : vector<8x32xi1> to vector<8x32xi32>
    %19 = arith.sitofp %18 : vector<8x32xi32> to vector<8x32xf32>
    %20 = tpu.iota {dimensions = array<i32: 1>} : vector<8x64xi32>
    %21 = vector.broadcast %12 : vector<8x1xi32> to vector<8x64xi32>
    %22 = arith.cmpi eq, %21, %20 : vector<8x64xi32>
    %23 = arith.extui %22 : vector<8x64xi1> to vector<8x64xi32>
    %24 = arith.sitofp %23 : vector<8x64xi32> to vector<8x64xf32>
    %cst = arith.constant dense<0.000000e+00> : vector<8x24xf32>
    %25 = tpu.matmul %19, %13, %cst {dimension_numbers = #tpu.dot_dimension_numbers<[1], [0], [0], [1], [0, 0, 1, 1], [], []>} : vector<8x32xf32>, vector<32x24xf32>, vector<8x24xf32> -> vector<8x24xf32>
    %cst_25 = arith.constant dense<0.000000e+00> : vector<8x24xf32>
    %26 = tpu.matmul %24, %14, %cst_25 {dimension_numbers = #tpu.dot_dimension_numbers<[1], [0], [0], [1], [0, 0, 1, 1], [], []>} : vector<8x64xf32>, vector<64x24xf32>, vector<8x24xf32> -> vector<8x24xf32>
    %cst_26 = arith.constant dense<0.000000e+00> : vector<8x64xf32>
    %27 = tpu.matmul %25, %0, %cst_26 {dimension_numbers = #tpu.dot_dimension_numbers<[1], [0], [0], [1], [0, 0, 1, 1], [], []>} : vector<8x24xf32>, vector<24x64xf32>, vector<8x64xf32> -> vector<8x64xf32>
    %cst_27 = arith.constant dense<0.000000e+00> : vector<8x64xf32>
    %28 = tpu.matmul %26, %1, %cst_27 {dimension_numbers = #tpu.dot_dimension_numbers<[1], [0], [0], [1], [0, 0, 1, 1], [], []>} : vector<8x24xf32>, vector<24x64xf32>, vector<8x64xf32> -> vector<8x64xf32>
    %29 = arith.addf %27, %28 : vector<8x64xf32>
    %30 = vector.broadcast %2 : vector<1x64xf32> to vector<8x64xf32>
    %31 = arith.addf %29, %30 : vector<8x64xf32>
    %cst_28 = arith.constant 0.000000e+00 : f32
    %32 = vector.broadcast %cst_28 : f32 to vector<8x64xf32>
    %33 = arith.maximumf %31, %32 : vector<8x64xf32>
    %cst_29 = arith.constant dense<0.000000e+00> : vector<8x32xf32>
    %34 = tpu.matmul %33, %3, %cst_29 {dimension_numbers = #tpu.dot_dimension_numbers<[1], [0], [0], [1], [0, 0, 1, 1], [], []>} : vector<8x64xf32>, vector<64x32xf32>, vector<8x32xf32> -> vector<8x32xf32>
    %35 = vector.broadcast %4 : vector<1x32xf32> to vector<8x32xf32>
    %36 = arith.addf %34, %35 : vector<8x32xf32>
    %cst_30 = arith.constant 0.000000e+00 : f32
    %37 = vector.broadcast %cst_30 : f32 to vector<8x32xf32>
    %38 = arith.maximumf %36, %37 : vector<8x32xf32>
    %cst_31 = arith.constant dense<0.000000e+00> : vector<8x16xf32>
    %39 = tpu.matmul %38, %5, %cst_31 {dimension_numbers = #tpu.dot_dimension_numbers<[1], [0], [0], [1], [0, 0, 1, 1], [], []>} : vector<8x32xf32>, vector<32x16xf32>, vector<8x16xf32> -> vector<8x16xf32>
    %40 = vector.broadcast %6 : vector<1x16xf32> to vector<8x16xf32>
    %41 = arith.addf %39, %40 : vector<8x16xf32>
    %cst_32 = arith.constant 0.000000e+00 : f32
    %42 = vector.broadcast %cst_32 : f32 to vector<8x16xf32>
    %43 = arith.maximumf %41, %42 : vector<8x16xf32>
    %44 = arith.mulf %25, %26 : vector<8x24xf32>
    %45 = vector.broadcast %7 : vector<1x16xf32> to vector<8x16xf32>
    %46 = arith.mulf %43, %45 : vector<8x16xf32>
    %cst_33 = arith.constant dense<0.000000e+00> : vector<8xf32>
    %47 = vector.multi_reduction <add>, %46, %cst_33 [1] : vector<8x16xf32> to vector<8xf32>
    %48 = vector.shape_cast %47 : vector<8xf32> to vector<8x1xf32>
    %49 = vector.broadcast %8 : vector<1x24xf32> to vector<8x24xf32>
    %50 = arith.mulf %44, %49 : vector<8x24xf32>
    %cst_34 = arith.constant dense<0.000000e+00> : vector<8xf32>
    %51 = vector.multi_reduction <add>, %50, %cst_34 [1] : vector<8x24xf32> to vector<8xf32>
    %52 = vector.shape_cast %51 : vector<8xf32> to vector<8x1xf32>
    %53 = arith.addf %48, %52 : vector<8x1xf32>
    %54 = vector.broadcast %9 : vector<1x1xf32> to vector<8x1xf32>
    %55 = arith.addf %53, %54 : vector<8x1xf32>
    %56 = arith.negf %55 : vector<8x1xf32>
    %57 = math.exp %56 : vector<8x1xf32>
    %cst_35 = arith.constant 1.000000e+00 : f32
    %58 = vector.broadcast %cst_35 : f32 to vector<8x1xf32>
    %59 = arith.addf %58, %57 : vector<8x1xf32>
    %60 = arith.divf %58, %59 : vector<8x1xf32>
    %c0_36 = arith.constant 0 : index
    %c0_37 = arith.constant 0 : index
    %61 = vector.load %arg14[%c0_36, %c0_37] : memref<8x1xf32, #tpu.memory_space<vmem>>, vector<8x1xf32>
    tpu.vector_store %arg14[%c0_36, %c0_37], %60 {strides = array<i32>} : memref<8x1xf32, #tpu.memory_space<vmem>>, vector<8x1xf32>,
    return
  }
  func.func @transform_0(%arg0: i32) -> (i32, i32) {
    %c0_i32 = arith.constant 0 : i32
    %c0_i32_0 = arith.constant 0 : i32
    return %arg0, %c0_i32 : i32, i32
  }
  func.func @transform_1(%arg0: i32) -> (i32, i32) {
    %c0_i32 = arith.constant 0 : i32
    %c0_i32_0 = arith.constant 0 : i32
    %c0_i32_1 = arith.constant 0 : i32
    return %c0_i32, %c0_i32_0 : i32, i32
  }
  func.func @transform_2(%arg0: i32) -> (i32, i32) {
    %c0_i32 = arith.constant 0 : i32
    %c0_i32_0 = arith.constant 0 : i32
    %c0_i32_1 = arith.constant 0 : i32
    return %c0_i32, %c0_i32_0 : i32, i32
  }
  func.func @transform_3(%arg0: i32) -> (i32, i32) {
    %c0_i32 = arith.constant 0 : i32
    %c0_i32_0 = arith.constant 0 : i32
    %c0_i32_1 = arith.constant 0 : i32
    return %c0_i32, %c0_i32_0 : i32, i32
  }
  func.func @transform_4(%arg0: i32) -> (i32, i32) {
    %c0_i32 = arith.constant 0 : i32
    %c0_i32_0 = arith.constant 0 : i32
    %c0_i32_1 = arith.constant 0 : i32
    return %c0_i32, %c0_i32_0 : i32, i32
  }
  func.func @transform_5(%arg0: i32) -> (i32, i32) {
    %c0_i32 = arith.constant 0 : i32
    %c0_i32_0 = arith.constant 0 : i32
    %c0_i32_1 = arith.constant 0 : i32
    return %c0_i32, %c0_i32_0 : i32, i32
  }
  func.func @transform_6(%arg0: i32) -> (i32, i32) {
    %c0_i32 = arith.constant 0 : i32
    %c0_i32_0 = arith.constant 0 : i32
    %c0_i32_1 = arith.constant 0 : i32
    return %c0_i32, %c0_i32_0 : i32, i32
  }
  func.func @transform_7(%arg0: i32) -> (i32, i32) {
    %c0_i32 = arith.constant 0 : i32
    %c0_i32_0 = arith.constant 0 : i32
    %c0_i32_1 = arith.constant 0 : i32
    return %c0_i32, %c0_i32_0 : i32, i32
  }
  func.func @transform_8(%arg0: i32) -> (i32, i32) {
    %c0_i32 = arith.constant 0 : i32
    %c0_i32_0 = arith.constant 0 : i32
    %c0_i32_1 = arith.constant 0 : i32
    return %c0_i32, %c0_i32_0 : i32, i32
  }
  func.func @transform_9(%arg0: i32) -> (i32, i32) {
    %c0_i32 = arith.constant 0 : i32
    %c0_i32_0 = arith.constant 0 : i32
    %c0_i32_1 = arith.constant 0 : i32
    return %c0_i32, %c0_i32_0 : i32, i32
  }
  func.func @transform_10(%arg0: i32) -> (i32, i32) {
    %c0_i32 = arith.constant 0 : i32
    %c0_i32_0 = arith.constant 0 : i32
    %c0_i32_1 = arith.constant 0 : i32
    return %c0_i32, %c0_i32_0 : i32, i32
  }
  func.func @transform_11(%arg0: i32) -> (i32, i32) {
    %c0_i32 = arith.constant 0 : i32
    %c0_i32_0 = arith.constant 0 : i32
    %c0_i32_1 = arith.constant 0 : i32
    return %c0_i32, %c0_i32_0 : i32, i32
  }
  func.func @transform_12(%arg0: i32) -> (i32, i32) {
    %c0_i32 = arith.constant 0 : i32
    %c0_i32_0 = arith.constant 0 : i32
    %c0_i32_1 = arith.constant 0 : i32
    return %c0_i32, %c0_i32_0 : i32, i32
  }
  func.func @transform_13(%arg0: i32) -> (i32, i32) {
    %c0_i32 = arith.constant 0 : i32
    %c0_i32_0 = arith.constant 0 : i32
    return %arg0, %c0_i32 : i32, i32
  }
}

</mosaic_0001>

<llo_original>
// kernel: tpu_custom_call.1
$region0: #{tpu_custom_call.1}
  #allocation0 [shape = 'u32[]', space=smem, size = 0x4, offset = 0x4, fixed_abs, tag = 'smem constant byte address 0x4 - core index']
  #allocation1 [shape = 'u32[144,128]{1,0:T(1,128)}', space=vmem, size = 0x12000, scoped, tag = 'internal scratch']
  #allocation2 [shape = 'f32[1,1]{1,0:T(1,128)S(1)}', space=vmem, size = 0x200, scoped, tag = 'scoped memory for tpu_custom_call.1']
  %s0 = inlined_call_operand.vmem [shape: s32[8,2], index: 0, kind: input, shape index: {}]
  %s1 = inlined_call_operand.vmem [shape: f32[32,24], index: 1, kind: input, shape index: {}]
  %s2 = inlined_call_operand.vmem [shape: f32[64,24], index: 2, kind: input, shape index: {}]
  %s3 = inlined_call_operand.vmem [shape: f32[24,64], index: 3, kind: input, shape index: {}]
  %s4 = inlined_call_operand.vmem [shape: f32[24,64], index: 4, kind: input, shape index: {}]
  %s5 = inlined_call_operand.vmem [shape: f32[1,64], index: 5, kind: input, shape index: {}]
  %s6 = inlined_call_operand.vmem [shape: f32[64,32], index: 6, kind: input, shape index: {}]
  %s7 = inlined_call_operand.vmem [shape: f32[1,32], index: 7, kind: input, shape index: {}]
  %s8 = inlined_call_operand.vmem [shape: f32[32,16], index: 8, kind: input, shape index: {}]
  %s9 = inlined_call_operand.vmem [shape: f32[1,16], index: 9, kind: input, shape index: {}]
  %s10 = inlined_call_operand.vmem [shape: f32[1,16], index: 10, kind: input, shape index: {}]
  %s11 = inlined_call_operand.vmem [shape: f32[1,24], index: 11, kind: input, shape index: {}]
  %s12 = inlined_call_operand.<no memory space> [shape: f32[1,1], index: 12, kind: input, shape index: {}]
  %s13 = inlined_call_operand.vmem [shape: f32[8,1], index: 13, kind: output, shape index: {}]
  %s14 = sld [smem:[#allocation0]]
  $region62: #{tpu_custom_call.1} parent=0
    _
  %s16 = ssub.s32 1, %s14
  %s17 = scalar_select 0, %s16, %s14
  %v18 = vstv %s12
  %19 = vst [vmem:[#allocation2] sm:$0x1] %v18
  // Predicated region
  $region2: #{tpu_custom_call.1} parent=0 // pred_check
    _
  $region3: #{tpu_custom_call.1} parent=0 // pred_check_branch
    %21 = sbr.rel (0) target = $region5
  $region4: #{tpu_custom_call.1} parent=0 // pred_region
    _
  $region5: #{tpu_custom_call.1} parent=0 // pred_fallthru
    _
  // Predicated region
  $region6: #{tpu_custom_call.1} parent=0 // pred_check
    _
  $region7: #{tpu_custom_call.1} parent=0 // pred_check_branch
    %23 = sbr.rel (0) target = $region9
  $region8: #{tpu_custom_call.1} parent=0 // pred_region
    _
  $region9: #{tpu_custom_call.1} parent=0 // pred_fallthru
    _
  // Predicated region
  $region10: #{tpu_custom_call.1} parent=0 // pred_check
    _
  $region11: #{tpu_custom_call.1} parent=0 // pred_check_branch
    %25 = sbr.rel (0) target = $region13
  $region12: #{tpu_custom_call.1} parent=0 // pred_region
    _
  $region13: #{tpu_custom_call.1} parent=0 // pred_fallthru
    _
  // Predicated region
  $region14: #{tpu_custom_call.1} parent=0 // pred_check
    _
  $region15: #{tpu_custom_call.1} parent=0 // pred_check_branch
    %27 = sbr.rel (0) target = $region17
  $region16: #{tpu_custom_call.1} parent=0 // pred_region
    _
  $region17: #{tpu_custom_call.1} parent=0 // pred_fallthru
    _
  // Predicated region
  $region18: #{tpu_custom_call.1} parent=0 // pred_check
    _
  $region19: #{tpu_custom_call.1} parent=0 // pred_check_branch
    %29 = sbr.rel (0) target = $region21
  $region20: #{tpu_custom_call.1} parent=0 // pred_region
    _
  $region21: #{tpu_custom_call.1} parent=0 // pred_fallthru
    _
  // Predicated region
  $region22: #{tpu_custom_call.1} parent=0 // pred_check
    _
  $region23: #{tpu_custom_call.1} parent=0 // pred_check_branch
    %31 = sbr.rel (0) target = $region25
  $region24: #{tpu_custom_call.1} parent=0 // pred_region
    _
  $region25: #{tpu_custom_call.1} parent=0 // pred_fallthru
    _
  // Predicated region
  $region26: #{tpu_custom_call.1} parent=0 // pred_check
    _
  $region27: #{tpu_custom_call.1} parent=0 // pred_check_branch
    %33 = sbr.rel (0) target = $region29
  $region28: #{tpu_custom_call.1} parent=0 // pred_region
    _
  $region29: #{tpu_custom_call.1} parent=0 // pred_fallthru
    _
  // Predicated region
  $region30: #{tpu_custom_call.1} parent=0 // pred_check
    _
  $region31: #{tpu_custom_call.1} parent=0 // pred_check_branch
    %35 = sbr.rel (0) target = $region33
  $region32: #{tpu_custom_call.1} parent=0 // pred_region
    _
  $region33: #{tpu_custom_call.1} parent=0 // pred_fallthru
    _
  // Predicated region
  $region34: #{tpu_custom_call.1} parent=0 // pred_check
    _
  $region35: #{tpu_custom_call.1} parent=0 // pred_check_branch
    %37 = sbr.rel (0) target = $region37
  $region36: #{tpu_custom_call.1} parent=0 // pred_region
    _
  $region37: #{tpu_custom_call.1} parent=0 // pred_fallthru
    _
  // Predicated region
  $region38: #{tpu_custom_call.1} parent=0 // pred_check
    _
  $region39: #{tpu_custom_call.1} parent=0 // pred_check_branch
    %39 = sbr.rel (0) target = $region41
  $region40: #{tpu_custom_call.1} parent=0 // pred_region
    _
  $region41: #{tpu_custom_call.1} parent=0 // pred_fallthru
    _
  // Predicated region
  $region42: #{tpu_custom_call.1} parent=0 // pred_check
    _
  $region43: #{tpu_custom_call.1} parent=0 // pred_check_branch
    %41 = sbr.rel (0) target = $region45
  $region44: #{tpu_custom_call.1} parent=0 // pred_region
    _
  $region45: #{tpu_custom_call.1} parent=0 // pred_fallthru
    _
  // Predicated region
  $region46: #{tpu_custom_call.1} parent=0 // pred_check
    _
  $region47: #{tpu_custom_call.1} parent=0 // pred_check_branch
    %43 = sbr.rel (0) target = $region49
  $region48: #{tpu_custom_call.1} parent=0 // pred_region
    _
  $region49: #{tpu_custom_call.1} parent=0 // pred_fallthru
    _
  // Predicated region
  $region50: #{tpu_custom_call.1} parent=0 // pred_check
    _
  $region51: #{tpu_custom_call.1} parent=0 // pred_check_branch
    %45 = sbr.rel (0) target = $region53
  $region52: #{tpu_custom_call.1} parent=0 // pred_region
    _
  $region53: #{tpu_custom_call.1} parent=0 // pred_fallthru
    _
  %v46 = vld [vmem:[%s3] sm:$0xff]
  %v47 = vld [vmem:[%s3 + $0x8] sm:$0xff]
  %v48 = vld [vmem:[%s3 + $0x10] sm:$0xff]
  %v49 = vld [vmem:[%s4] sm:$0xff]
  %v50 = vld [vmem:[%s4 + $0x8] sm:$0xff]
  %v51 = vld [vmem:[%s4 + $0x10] sm:$0xff]
  %v52 = vld [vmem:[%s5] sm:$0x1]
  %v53 = vld [vmem:[%s6] sm:$0xff]
  %v54 = vld [vmem:[%s6 + $0x8] sm:$0xff]
  %v55 = vld [vmem:[%s6 + $0x10] sm:$0xff]
  %v56 = vld [vmem:[%s6 + $0x18] sm:$0xff]
  %v57 = vld [vmem:[%s6 + $0x20] sm:$0xff]
  %v58 = vld [vmem:[%s6 + $0x28] sm:$0xff]
  %v59 = vld [vmem:[%s6 + $0x30] sm:$0xff]
  %v60 = vld [vmem:[%s6 + $0x38] sm:$0xff]
  %v61 = vld [vmem:[%s7] sm:$0x1]
  %v62 = vld [vmem:[%s8] sm:$0xff]
  %v63 = vld [vmem:[%s8 + $0x8] sm:$0xff]
  %v64 = vld [vmem:[%s8 + $0x10] sm:$0xff]
  %v65 = vld [vmem:[%s8 + $0x18] sm:$0xff]
  %v66 = vld [vmem:[%s9] sm:$0x1]
  %v67 = vld [vmem:[%s10] sm:$0x1]
  %v68 = vld [vmem:[%s11] sm:$0x1]
  %v69 = vld [vmem:[#allocation2] sm:$0x1]
  %v70 = vld [vmem:[%s0] sm:$0xff]
  %v71 = vld [vmem:[%s1] sm:$0xff]
  %v72 = vld [vmem:[%s1 + $0x8] sm:$0xff]
  %v73 = vld [vmem:[%s1 + $0x10] sm:$0xff]
  %v74 = vld [vmem:[%s1 + $0x18] sm:$0xff]
  %v75 = vld [vmem:[%s2] sm:$0xff]
  %v76 = vld [vmem:[%s2 + $0x8] sm:$0xff]
  %v77 = vld [vmem:[%s2 + $0x10] sm:$0xff]
  %v78 = vld [vmem:[%s2 + $0x18] sm:$0xff]
  %v79 = vld [vmem:[%s2 + $0x20] sm:$0xff]
  %v80 = vld [vmem:[%s2 + $0x28] sm:$0xff]
  %v81 = vld [vmem:[%s2 + $0x30] sm:$0xff]
  %v82 = vld [vmem:[%s2 + $0x38] sm:$0xff]
  %v83 = vlaneseq
  %v84 = vand.u32 %v83, 127
  %85 = vset.pattern.permute.xlu0 0
  %86 = vperm.xlu0 %85, %v70
  %v87 = vpop.permute.xlu0 %86
  %vm88 = vcmp.eq.s32.totalorder %v87, %v84
  %v89 = vsel %vm88, 1, 0
  %v90 = vcvt.s32.f32 %v89
  %91 = vset.pattern.permute.xlu0 1
  %92 = vperm.xlu0 %91, %v70
  %v93 = vpop.permute.xlu0 %92
  %vm94 = vcmp.eq.s32.totalorder %v93, %v84
  %v95 = vsel %vm94, 1, 0
  %v96 = vcvt.s32.f32 %v95
  %vm97 = vcmask 261120
  %v99 = vsel %vm97, %v90, 0
  %101 = vmatprep.subr.mxu0 0.0
  %102 = vmatpush1.msra.mxu0 %v71
  %103 = vmatprep.subr.mxu0 0.0
  %104 = vmatpush1.msra.mxu0 %v72
  %105 = vmatprep.subr.mxu0 0.0
  %106 = vmatpush1.msra.mxu0 %v73
  %107 = vmatprep.subr.mxu0 0.0
  %108 = vmatpush1.msra.mxu0 %v74
  %109 = vmatprep.subr.mxu0 0.0
  %110 = vmatpush1.msra.mxu0 0.0
  %111 = vmatprep.subr.mxu0 0.0
  %112 = vmatpush1.msra.mxu0 0.0
  %113 = vmatprep.subr.mxu0 0.0
  %114 = vmatpush1.msra.mxu0 0.0
  %115 = vmatprep.subr.mxu0 0.0
  %116 = vmatpush1.msra.mxu0 0.0
  %117 = vmatprep.subr.mxu0 0.0
  %118 = vmatpush1.msra.mxu0 0.0
  %119 = vmatprep.subr.mxu0 0.0
  %120 = vmatpush1.msra.mxu0 0.0
  %121 = vmatprep.subr.mxu0 0.0
  %122 = vmatpush1.msra.mxu0 0.0
  %123 = vmatprep.subr.mxu0 0.0
  %124 = vmatpush1.msra.mxu0 0.0
  %125 = vmatprep.subr.mxu0 0.0
  %126 = vmatpush1.msra.mxu0 0.0
  %127 = vmatprep.subr.mxu0 0.0
  %128 = vmatpush1.msra.mxu0 0.0
  %129 = vmatprep.subr.mxu0 0.0
  %130 = vmatpush1.msra.mxu0 0.0
  %131 = vmatprep.subr.mxu0 0.0
  %132 = vmatpush1.msra.mxu0 0.0
  %133 = vmatprep.subr.mxu0 0.0
  %134 = vmatpush1.msra.mxu0 0.0
  %135 = vmatprep.subr.mxu0 0.0
  %136 = vmatpush1.msra.mxu0 0.0
  %137 = vmatprep.subr.mxu0 0.0
  %138 = vmatpush1.msra.mxu0 0.0
  %139 = vmatprep.subr.mxu0 0.0
  %140 = vmatpush1.msra.mxu0 0.0
  %141 = vmatprep.subr.mxu0 0.0
  %142 = vmatpush1.msra.mxu0 0.0
  %143 = vmatprep.subr.mxu0 0.0
  %144 = vmatpush1.msra.mxu0 0.0
  %145 = vmatprep.subr.mxu0 0.0
  %146 = vmatpush1.msra.mxu0 0.0
  %147 = vmatprep.subr.mxu0 0.0
  %148 = vmatpush1.msra.mxu0 0.0
  %149 = vmatprep.subr.mxu0 0.0
  %150 = vmatpush1.msra.mxu0 0.0
  %151 = vmatprep.subr.mxu0 0.0
  %152 = vmatpush1.msra.mxu0 0.0
  %153 = vmatprep.subr.mxu0 0.0
  %154 = vmatpush1.msra.mxu0 0.0
  %155 = vmatprep.subr.mxu0 0.0
  %156 = vmatpush1.msra.mxu0 0.0
  %157 = vmatprep.subr.mxu0 0.0
  %158 = vmatpush1.msra.mxu0 0.0
  %159 = vmatprep.subr.mxu0 0.0
  %160 = vmatpush1.msra.mxu0 0.0
  %161 = vmatprep.subr.mxu0 0.0
  %162 = vmatpush1.msra.mxu0 0.0
  %163 = vmatprep.subr.mxu0 0.0
  %164 = vmatpush1.msra.mxu0 0.0
  %165 = vmatprep.mubr.f32.mxu0 0.0
  %166 = vmatmul.mubr.f32.gmra.mrb[0].mxu0 %v99
  %v167 = vpop.f32.mrb[0].mxu0
  %v168 = vadd.f32 0.0, %v167
  %v169 = vpop.f32.mrb[0].mxu0
  %170 = vdwg.mxu0
  %vm171 = vcmask 523264
  %v173 = vsel %vm171, %v96, 0
  %175 = vmatprep.subr.mxu0 0.0
  %176 = vmatpush1.msra.mxu0 %v75
  %177 = vmatprep.subr.mxu0 0.0
  %178 = vmatpush1.msra.mxu0 %v76
  %179 = vmatprep.subr.mxu0 0.0
  %180 = vmatpush1.msra.mxu0 %v77
  %181 = vmatprep.subr.mxu0 0.0
  %182 = vmatpush1.msra.mxu0 %v78
  %183 = vmatprep.subr.mxu0 0.0
  %184 = vmatpush1.msra.mxu0 %v79
  %185 = vmatprep.subr.mxu0 0.0
  %186 = vmatpush1.msra.mxu0 %v80
  %187 = vmatprep.subr.mxu0 0.0
  %188 = vmatpush1.msra.mxu0 %v81
  %189 = vmatprep.subr.mxu0 0.0
  %190 = vmatpush1.msra.mxu0 %v82
  %191 = vmatprep.subr.mxu0 0.0
  %192 = vmatpush1.msra.mxu0 0.0
  %193 = vmatprep.subr.mxu0 0.0
  %194 = vmatpush1.msra.mxu0 0.0
  %195 = vmatprep.subr.mxu0 0.0
  %196 = vmatpush1.msra.mxu0 0.0
  %197 = vmatprep.subr.mxu0 0.0
  %198 = vmatpush1.msra.mxu0 0.0
  %199 = vmatprep.subr.mxu0 0.0
  %200 = vmatpush1.msra.mxu0 0.0
  %201 = vmatprep.subr.mxu0 0.0
  %202 = vmatpush1.msra.mxu0 0.0
  %203 = vmatprep.subr.mxu0 0.0
  %204 = vmatpush1.msra.mxu0 0.0
  %205 = vmatprep.subr.mxu0 0.0
  %206 = vmatpush1.msra.mxu0 0.0
  %207 = vmatprep.subr.mxu0 0.0
  %208 = vmatpush1.msra.mxu0 0.0
  %209 = vmatprep.subr.mxu0 0.0
  %210 = vmatpush1.msra.mxu0 0.0
  %211 = vmatprep.subr.mxu0 0.0
  %212 = vmatpush1.msra.mxu0 0.0
  %213 = vmatprep.subr.mxu0 0.0
  %214 = vmatpush1.msra.mxu0 0.0
  %215 = vmatprep.subr.mxu0 0.0
  %216 = vmatpush1.msra.mxu0 0.0
  %217 = vmatprep.subr.mxu0 0.0
  %218 = vmatpush1.msra.mxu0 0.0
  %219 = vmatprep.subr.mxu0 0.0
  %220 = vmatpush1.msra.mxu0 0.0
  %221 = vmatprep.subr.mxu0 0.0
  %222 = vmatpush1.msra.mxu0 0.0
  %223 = vmatprep.subr.mxu0 0.0
  %224 = vmatpush1.msra.mxu0 0.0
  %225 = vmatprep.subr.mxu0 0.0
  %226 = vmatpush1.msra.mxu0 0.0
  %227 = vmatprep.subr.mxu0 0.0
  %228 = vmatpush1.msra.mxu0 0.0
  %229 = vmatprep.subr.mxu0 0.0
  %230 = vmatpush1.msra.mxu0 0.0
  %231 = vmatprep.subr.mxu0 0.0
  %232 = vmatpush1.msra.mxu0 0.0
  %233 = vmatprep.subr.mxu0 0.0
  %234 = vmatpush1.msra.mxu0 0.0
  %235 = vmatprep.subr.mxu0 0.0
  %236 = vmatpush1.msra.mxu0 0.0
  %237 = vmatprep.subr.mxu0 0.0
  %238 = vmatpush1.msra.mxu0 0.0
  %239 = vmatprep.mubr.f32.mxu0 0.0
  %240 = vmatmul.mubr.f32.gmra.mrb[0].mxu0 %v173
  %v241 = vpop.f32.mrb[0].mxu0
  %v242 = vadd.f32 0.0, %v241
  %v243 = vpop.f32.mrb[0].mxu0
  %244 = vdwg.mxu0
  %vm245 = vcmask 195584
  %v247 = vsel %vm245, %v242, 0
  %249 = vmatprep.subr.mxu0 0.0
  %250 = vmatpush1.msra.mxu0 %v49
  %251 = vmatprep.subr.mxu0 0.0
  %252 = vmatpush1.msra.mxu0 %v50
  %253 = vmatprep.subr.mxu0 0.0
  %254 = vmatpush1.msra.mxu0 %v51
  %255 = vmatprep.subr.mxu0 0.0
  %256 = vmatpush1.msra.mxu0 0.0
  %257 = vmatprep.subr.mxu0 0.0
  %258 = vmatpush1.msra.mxu0 0.0
  %259 = vmatprep.subr.mxu0 0.0
  %260 = vmatpush1.msra.mxu0 0.0
  %261 = vmatprep.subr.mxu0 0.0
  %262 = vmatpush1.msra.mxu0 0.0
  %263 = vmatprep.subr.mxu0 0.0
  %264 = vmatpush1.msra.mxu0 0.0
  %265 = vmatprep.subr.mxu0 0.0
  %266 = vmatpush1.msra.mxu0 0.0
  %267 = vmatprep.subr.mxu0 0.0
  %268 = vmatpush1.msra.mxu0 0.0
  %269 = vmatprep.subr.mxu0 0.0
  %270 = vmatpush1.msra.mxu0 0.0
  %271 = vmatprep.subr.mxu0 0.0
  %272 = vmatpush1.msra.mxu0 0.0
  %273 = vmatprep.subr.mxu0 0.0
  %274 = vmatpush1.msra.mxu0 0.0
  %275 = vmatprep.subr.mxu0 0.0
  %276 = vmatpush1.msra.mxu0 0.0
  %277 = vmatprep.subr.mxu0 0.0
  %278 = vmatpush1.msra.mxu0 0.0
  %279 = vmatprep.subr.mxu0 0.0
  %280 = vmatpush1.msra.mxu0 0.0
  %281 = vmatprep.subr.mxu0 0.0
  %282 = vmatpush1.msra.mxu0 0.0
  %283 = vmatprep.subr.mxu0 0.0
  %284 = vmatpush1.msra.mxu0 0.0
  %285 = vmatprep.subr.mxu0 0.0
  %286 = vmatpush1.msra.mxu0 0.0
  %287 = vmatprep.subr.mxu0 0.0
  %288 = vmatpush1.msra.mxu0 0.0
  %289 = vmatprep.subr.mxu0 0.0
  %290 = vmatpush1.msra.mxu0 0.0
  %291 = vmatprep.subr.mxu0 0.0
  %292 = vmatpush1.msra.mxu0 0.0
  %293 = vmatprep.subr.mxu0 0.0
  %294 = vmatpush1.msra.mxu0 0.0
  %295 = vmatprep.subr.mxu0 0.0
  %296 = vmatpush1.msra.mxu0 0.0
  %297 = vmatprep.subr.mxu0 0.0
  %298 = vmatpush1.msra.mxu0 0.0
  %299 = vmatprep.subr.mxu0 0.0
  %300 = vmatpush1.msra.mxu0 0.0
  %301 = vmatprep.subr.mxu0 0.0
  %302 = vmatpush1.msra.mxu0 0.0
  %303 = vmatprep.subr.mxu0 0.0
  %304 = vmatpush1.msra.mxu0 0.0
  %305 = vmatprep.subr.mxu0 0.0
  %306 = vmatpush1.msra.mxu0 0.0
  %307 = vmatprep.subr.mxu0 0.0
  %308 = vmatpush1.msra.mxu0 0.0
  %309 = vmatprep.subr.mxu0 0.0
  %310 = vmatpush1.msra.mxu0 0.0
  %311 = vmatprep.subr.mxu0 0.0
  %312 = vmatpush1.msra.mxu0 0.0
  %313 = vmatprep.mubr.f32.mxu0 0.0
  %314 = vmatmul.mubr.f32.gmra.mrb[0].mxu0 %v247
  %v315 = vpop.f32.mrb[0].mxu0
  %v316 = vadd.f32 0.0, %v315
  %v317 = vpop.f32.mrb[0].mxu0
  %318 = vdwg.mxu0
  %v320 = vsel %vm245, %v168, 0
  %322 = vmatprep.subr.mxu0 0.0
  %323 = vmatpush1.msra.mxu0 %v46
  %324 = vmatprep.subr.mxu0 0.0
  %325 = vmatpush1.msra.mxu0 %v47
  %326 = vmatprep.subr.mxu0 0.0
  %327 = vmatpush1.msra.mxu0 %v48
  %328 = vmatprep.subr.mxu0 0.0
  %329 = vmatpush1.msra.mxu0 0.0
  %330 = vmatprep.subr.mxu0 0.0
  %331 = vmatpush1.msra.mxu0 0.0
  %332 = vmatprep.subr.mxu0 0.0
  %333 = vmatpush1.msra.mxu0 0.0
  %334 = vmatprep.subr.mxu0 0.0
  %335 = vmatpush1.msra.mxu0 0.0
  %336 = vmatprep.subr.mxu0 0.0
  %337 = vmatpush1.msra.mxu0 0.0
  %338 = vmatprep.subr.mxu0 0.0
  %339 = vmatpush1.msra.mxu0 0.0
  %340 = vmatprep.subr.mxu0 0.0
  %341 = vmatpush1.msra.mxu0 0.0
  %342 = vmatprep.subr.mxu0 0.0
  %343 = vmatpush1.msra.mxu0 0.0
  %344 = vmatprep.subr.mxu0 0.0
  %345 = vmatpush1.msra.mxu0 0.0
  %346 = vmatprep.subr.mxu0 0.0
  %347 = vmatpush1.msra.mxu0 0.0
  %348 = vmatprep.subr.mxu0 0.0
  %349 = vmatpush1.msra.mxu0 0.0
  %350 = vmatprep.subr.mxu0 0.0
  %351 = vmatpush1.msra.mxu0 0.0
  %352 = vmatprep.subr.mxu0 0.0
  %353 = vmatpush1.msra.mxu0 0.0
  %354 = vmatprep.subr.mxu0 0.0
  %355 = vmatpush1.msra.mxu0 0.0
  %356 = vmatprep.subr.mxu0 0.0
  %357 = vmatpush1.msra.mxu0 0.0
  %358 = vmatprep.subr.mxu0 0.0
  %359 = vmatpush1.msra.mxu0 0.0
  %360 = vmatprep.subr.mxu0 0.0
  %361 = vmatpush1.msra.mxu0 0.0
  %362 = vmatprep.subr.mxu0 0.0
  %363 = vmatpush1.msra.mxu0 0.0
  %364 = vmatprep.subr.mxu0 0.0
  %365 = vmatpush1.msra.mxu0 0.0
  %366 = vmatprep.subr.mxu0 0.0
  %367 = vmatpush1.msra.mxu0 0.0
  %368 = vmatprep.subr.mxu0 0.0
  %369 = vmatpush1.msra.mxu0 0.0
  %370 = vmatprep.subr.mxu0 0.0
  %371 = vmatpush1.msra.mxu0 0.0
  %372 = vmatprep.subr.mxu0 0.0
  %373 = vmatpush1.msra.mxu0 0.0
  %374 = vmatprep.subr.mxu0 0.0
  %375 = vmatpush1.msra.mxu0 0.0
  %376 = vmatprep.subr.mxu0 0.0
  %377 = vmatpush1.msra.mxu0 0.0
  %378 = vmatprep.subr.mxu0 0.0
  %379 = vmatpush1.msra.mxu0 0.0
  %380 = vmatprep.subr.mxu0 0.0
  %381 = vmatpush1.msra.mxu0 0.0
  %382 = vmatprep.subr.mxu0 0.0
  %383 = vmatpush1.msra.mxu0 0.0
  %384 = vmatprep.subr.mxu0 0.0
  %385 = vmatpush1.msra.mxu0 0.0
  %386 = vmatprep.mubr.f32.mxu0 0.0
  %387 = vmatmul.mubr.f32.gmra.mrb[0].mxu0 %v320
  %v388 = vpop.f32.mrb[0].mxu0
  %v389 = vadd.f32 %v316, %v388
  %v390 = vpop.f32.mrb[0].mxu0
  %391 = vdwg.mxu0
  %v393 = vlaneseq
  %v394 = vshrl.u32 %v393, 7
  %v395 = vsub.s32 0, %v394
  %v396 = vrot.slane %v52, %v395
  %v398 = vadd.f32 %v389, %v396
  %v399 = vmax.f32 %v398, 0.0
  %v401 = vlaneseq
  %v402 = vshrl.u32 %v401, 7
  %v403 = vsub.s32 0, %v402
  %v404 = vrot.slane %v61, %v403
  %v407 = vsel %vm171, %v399, 0
  %409 = vmatprep.subr.mxu0 0.0
  %410 = vmatpush1.msra.mxu0 %v53
  %411 = vmatprep.subr.mxu0 0.0
  %412 = vmatpush1.msra.mxu0 %v54
  %413 = vmatprep.subr.mxu0 0.0
  %414 = vmatpush1.msra.mxu0 %v55
  %415 = vmatprep.subr.mxu0 0.0
  %416 = vmatpush1.msra.mxu0 %v56
  %417 = vmatprep.subr.mxu0 0.0
  %418 = vmatpush1.msra.mxu0 %v57
  %419 = vmatprep.subr.mxu0 0.0
  %420 = vmatpush1.msra.mxu0 %v58
  %421 = vmatprep.subr.mxu0 0.0
  %422 = vmatpush1.msra.mxu0 %v59
  %423 = vmatprep.subr.mxu0 0.0
  %424 = vmatpush1.msra.mxu0 %v60
  %425 = vmatprep.subr.mxu0 0.0
  %426 = vmatpush1.msra.mxu0 0.0
  %427 = vmatprep.subr.mxu0 0.0
  %428 = vmatpush1.msra.mxu0 0.0
  %429 = vmatprep.subr.mxu0 0.0
  %430 = vmatpush1.msra.mxu0 0.0
  %431 = vmatprep.subr.mxu0 0.0
  %432 = vmatpush1.msra.mxu0 0.0
  %433 = vmatprep.subr.mxu0 0.0
  %434 = vmatpush1.msra.mxu0 0.0
  %435 = vmatprep.subr.mxu0 0.0
  %436 = vmatpush1.msra.mxu0 0.0
  %437 = vmatprep.subr.mxu0 0.0
  %438 = vmatpush1.msra.mxu0 0.0
  %439 = vmatprep.subr.mxu0 0.0
  %440 = vmatpush1.msra.mxu0 0.0
  %441 = vmatprep.subr.mxu0 0.0
  %442 = vmatpush1.msra.mxu0 0.0
  %443 = vmatprep.subr.mxu0 0.0
  %444 = vmatpush1.msra.mxu0 0.0
  %445 = vmatprep.subr.mxu0 0.0
  %446 = vmatpush1.msra.mxu0 0.0
  %447 = vmatprep.subr.mxu0 0.0
  %448 = vmatpush1.msra.mxu0 0.0
  %449 = vmatprep.subr.mxu0 0.0
  %450 = vmatpush1.msra.mxu0 0.0
  %451 = vmatprep.subr.mxu0 0.0
  %452 = vmatpush1.msra.mxu0 0.0
  %453 = vmatprep.subr.mxu0 0.0
  %454 = vmatpush1.msra.mxu0 0.0
  %455 = vmatprep.subr.mxu0 0.0
  %456 = vmatpush1.msra.mxu0 0.0
  %457 = vmatprep.subr.mxu0 0.0
  %458 = vmatpush1.msra.mxu0 0.0
  %459 = vmatprep.subr.mxu0 0.0
  %460 = vmatpush1.msra.mxu0 0.0
  %461 = vmatprep.subr.mxu0 0.0
  %462 = vmatpush1.msra.mxu0 0.0
  %463 = vmatprep.subr.mxu0 0.0
  %464 = vmatpush1.msra.mxu0 0.0
  %465 = vmatprep.subr.mxu0 0.0
  %466 = vmatpush1.msra.mxu0 0.0
  %467 = vmatprep.subr.mxu0 0.0
  %468 = vmatpush1.msra.mxu0 0.0
  %469 = vmatprep.subr.mxu0 0.0
  %470 = vmatpush1.msra.mxu0 0.0
  %471 = vmatprep.subr.mxu0 0.0
  %472 = vmatpush1.msra.mxu0 0.0
  %473 = vmatprep.mubr.f32.mxu0 0.0
  %474 = vmatmul.mubr.f32.gmra.mrb[0].mxu0 %v407
  %v475 = vpop.f32.mrb[0].mxu0
  %v476 = vadd.f32 %v404, %v475
  %v477 = vpop.f32.mrb[0].mxu0
  %478 = vdwg.mxu0
  %v479 = vmax.f32 %v476, 0.0
  %v481 = vlaneseq
  %v482 = vshrl.u32 %v481, 7
  %v483 = vsub.s32 0, %v482
  %v484 = vrot.slane %v66, %v483
  %v487 = vsel %vm97, %v479, 0
  %489 = vmatprep.subr.mxu0 0.0
  %490 = vmatpush1.msra.mxu0 %v62
  %491 = vmatprep.subr.mxu0 0.0
  %492 = vmatpush1.msra.mxu0 %v63
  %493 = vmatprep.subr.mxu0 0.0
  %494 = vmatpush1.msra.mxu0 %v64
  %495 = vmatprep.subr.mxu0 0.0
  %496 = vmatpush1.msra.mxu0 %v65
  %497 = vmatprep.subr.mxu0 0.0
  %498 = vmatpush1.msra.mxu0 0.0
  %499 = vmatprep.subr.mxu0 0.0
  %500 = vmatpush1.msra.mxu0 0.0
  %501 = vmatprep.subr.mxu0 0.0
  %502 = vmatpush1.msra.mxu0 0.0
  %503 = vmatprep.subr.mxu0 0.0
  %504 = vmatpush1.msra.mxu0 0.0
  %505 = vmatprep.subr.mxu0 0.0
  %506 = vmatpush1.msra.mxu0 0.0
  %507 = vmatprep.subr.mxu0 0.0
  %508 = vmatpush1.msra.mxu0 0.0
  %509 = vmatprep.subr.mxu0 0.0
  %510 = vmatpush1.msra.mxu0 0.0
  %511 = vmatprep.subr.mxu0 0.0
  %512 = vmatpush1.msra.mxu0 0.0
  %513 = vmatprep.subr.mxu0 0.0
  %514 = vmatpush1.msra.mxu0 0.0
  %515 = vmatprep.subr.mxu0 0.0
  %516 = vmatpush1.msra.mxu0 0.0
  %517 = vmatprep.subr.mxu0 0.0
  %518 = vmatpush1.msra.mxu0 0.0
  %519 = vmatprep.subr.mxu0 0.0
  %520 = vmatpush1.msra.mxu0 0.0
  %521 = vmatprep.subr.mxu0 0.0
  %522 = vmatpush1.msra.mxu0 0.0
  %523 = vmatprep.subr.mxu0 0.0
  %524 = vmatpush1.msra.mxu0 0.0
  %525 = vmatprep.subr.mxu0 0.0
  %526 = vmatpush1.msra.mxu0 0.0
  %527 = vmatprep.subr.mxu0 0.0
  %528 = vmatpush1.msra.mxu0 0.0
  %529 = vmatprep.subr.mxu0 0.0
  %530 = vmatpush1.msra.mxu0 0.0
  %531 = vmatprep.subr.mxu0 0.0
  %532 = vmatpush1.msra.mxu0 0.0
  %533 = vmatprep.subr.mxu0 0.0
  %534 = vmatpush1.msra.mxu0 0.0
  %535 = vmatprep.subr.mxu0 0.0
  %536 = vmatpush1.msra.mxu0 0.0
  %537 = vmatprep.subr.mxu0 0.0
  %538 = vmatpush1.msra.mxu0 0.0
  %539 = vmatprep.subr.mxu0 0.0
  %540 = vmatpush1.msra.mxu0 0.0
  %541 = vmatprep.subr.mxu0 0.0
  %542 = vmatpush1.msra.mxu0 0.0
  %543 = vmatprep.subr.mxu0 0.0
  %544 = vmatpush1.msra.mxu0 0.0
  %545 = vmatprep.subr.mxu0 0.0
  %546 = vmatpush1.msra.mxu0 0.0
  %547 = vmatprep.subr.mxu0 0.0
  %548 = vmatpush1.msra.mxu0 0.0
  %549 = vmatprep.subr.mxu0 0.0
  %550 = vmatpush1.msra.mxu0 0.0
  %551 = vmatprep.subr.mxu0 0.0
  %552 = vmatpush1.msra.mxu0 0.0
  %553 = vmatprep.mubr.f32.mxu0 0.0
  %554 = vmatmul.mubr.f32.gmra.mrb[0].mxu0 %v487
  %v555 = vpop.f32.mrb[0].mxu0
  %v556 = vadd.f32 %v484, %v555
  %v557 = vpop.f32.mrb[0].mxu0
  %558 = vdwg.mxu0
  %v559 = vmax.f32 %v556, 0.0
  %v560 = vmul.f32 %v168, %v242
  %v562 = vlaneseq
  %v563 = vshrl.u32 %v562, 7
  %v564 = vsub.s32 0, %v563
  %v565 = vrot.slane %v67, %v564
  %v567 = vmul.f32 %v559, %v565
  %vm568 = vcmask 130048
  %v569 = vsel %vm568, %v567, 0.0
  %570 = vadd.xlane.f32.xlu0 %v569
  %v571 = vpop.xlane.xlu0 %570
  %v573 = vlaneseq
  %v574 = vshrl.u32 %v573, 7
  %v575 = vsub.s32 0, %v574
  %v576 = vrot.slane %v68, %v575
  %v578 = vmul.f32 %v560, %v576
  %v579 = vsel %vm245, %v578, 0.0
  %580 = vadd.xlane.f32.xlu0 %v579
  %v581 = vpop.xlane.xlu0 %580
  %v582 = vadd.f32 %v571, %v581
  %v584 = vlaneseq
  %v585 = vshrl.u32 %v584, 7
  %v586 = vsub.s32 0, %v585
  %v587 = vrot.slane %v69, %v586
  %v589 = vadd.f32 %v582, %v587
  %v590 = vxor.u32 %v589, 2147483648
  %v591 = vmul.f32 %v590, 1.442695
  %v592 = vpow.pop %v591
  %v593 = vadd.f32 %v592, 1.0
  %v594 = vrcp.pop %v593
  %v595 = vmul.f32 1.0, %v594
  %vm596 = vcmask 7168
  %597 = vst.msk [vmem:[%s13] sm:$0xff] %vm596, %v595
  // Predicated region
  $region54: #{tpu_custom_call.1} parent=0 // pred_check
    _
  $region55: #{tpu_custom_call.1} parent=0 // pred_check_branch
    %599 = sbr.rel (0) target = $region57
  $region56: #{tpu_custom_call.1} parent=0 // pred_region
    _
  $region57: #{tpu_custom_call.1} parent=0 // pred_fallthru
    _
  // Predicated region
  $region58: #{tpu_custom_call.1} parent=0 // pred_check
    _
  $region59: #{tpu_custom_call.1} parent=0 // pred_check_branch
    %601 = sbr.rel (0) target = $region61
  $region60: #{tpu_custom_call.1} parent=0 // pred_region
    _
  $region61: #{tpu_custom_call.1} parent=0 // pred_fallthru
    _

</llo_original>
